<compile_context>
chip_gen: v7x
topology: tpu7x:2x2x1
jax: 0.10.0
libtpu: 0.0.40
codegen_flags: <defaults>
</compile_context>

<pallas_src>
import functools

import jax
import jax.numpy as jnp
from jax.experimental import pallas as pl
from jax.experimental.pallas import tpu as pltpu

LANE = 128          # vreg lane width
SUB_F32 = 8         # f32 sublane count (shape of the per-tile partial slab)
MAX_TILE_ROWS = 2048  # 2048*128*4B = 1 MiB per f32 input buffer (x2 pipeline)


def _round_up(x, m):
    return ((x + m - 1) // m) * m


def _sq_sum_tile_kernel(x_ref, o_ref, *, shift, rows, tile_rows, need_mask):
    """Per-tile partial sum of (x - shift)^2, reduced to an (8, 128) slab."""
    x = x_ref[...].astype(jnp.float32)
    d = x - shift
    sq = d * d
    if need_mask:
        # Last tile may overrun the array; zero out-of-range rows.
        row0 = pl.program_id(0) * tile_rows
        row_ids = row0 + jax.lax.broadcasted_iota(jnp.int32, (tile_rows, LANE), 0)
        sq = jnp.where(row_ids < rows, sq, 0.0)
    # Pure-VPU reduction: fold groups of 8 sublanes onto a single vreg slab.
    o_ref[0] = jnp.sum(sq.reshape(tile_rows // SUB_F32, SUB_F32, LANE), axis=0)


def _sq_sum(x, shift):
    """sum((x - shift)^2) over all elements via a tiled Pallas reduction."""
    flat = x.reshape(-1)
    n = flat.shape[0]
    itemsize = jnp.dtype(flat.dtype).itemsize
    sub = {4: 8, 2: 16, 1: 32}.get(itemsize, 8)
    rows = pl.cdiv(n, LANE)

    if n % LANE != 0 or rows % sub != 0:
        # Rare ragged case: tail-only pad with the sum-neutral value `shift`
        # (padded elements contribute exactly 0 to the sum).
        rows = _round_up(rows, sub)
        flat = jnp.pad(flat, (0, rows * LANE - n),
                       constant_values=jnp.asarray(shift, flat.dtype))
    # Typical NCHW case: this is a pure reshape, no extra HBM traffic.
    x2d = flat.reshape(rows, LANE)

    tile_rows = min(MAX_TILE_ROWS, rows)          # multiple of `sub`
    num_tiles = pl.cdiv(rows, tile_rows)
    need_mask = (rows % tile_rows) != 0

    kernel = functools.partial(
        _sq_sum_tile_kernel, shift=float(shift), rows=rows,
        tile_rows=tile_rows, need_mask=need_mask)

    partials = pl.pallas_call(
        kernel,
        out_shape=jax.ShapeDtypeStruct((num_tiles, SUB_F32, LANE), jnp.float32),
        grid_spec=pltpu.PrefetchScalarGridSpec(
            num_scalar_prefetch=0,
            grid=(num_tiles,),
            in_specs=[pl.BlockSpec((tile_rows, LANE), lambda i: (i, 0))],
            out_specs=pl.BlockSpec((1, SUB_F32, LANE), lambda i: (i, 0, 0)),
        ),
        compiler_params=pltpu.CompilerParams(
            dimension_semantics=("parallel",),   # megacore-shardable on v7x
        ),
    )(x2d)

    # Single cheap final reduction over (num_tiles, 8, 128) partials.
    return jnp.sum(partials), n


@jax.jit
def discriminate_loss(real_outputs, fake_outputs):
    r_sum, n_r = _sq_sum(real_outputs, 1.0)
    f_sum, n_f = _sq_sum(fake_outputs, 0.0)
    # The 1/2 from the loss is folded into the final division.
    return r_sum / jnp.float32(2 * n_r) + f_sum / jnp.float32(2 * n_f)


if __name__ == "__main__":
    key = jax.random.PRNGKey(0)
    k1, k2 = jax.random.split(key)

    # Discriminator outputs, NCHW-style patch-GAN logits: (batch=2, ch=4, 16, 16)
    real_outputs = jax.random.normal(k1, (2, 4, 16, 16), dtype=jnp.float32)
    fake_outputs = jax.random.normal(k2, (2, 4, 16, 16), dtype=jnp.float32)

    loss = discriminate_loss(real_outputs, fake_outputs)
    loss = jax.block_until_ready(loss)

    # Pure-JAX reference check.
    ref = jnp.mean((real_outputs - 1.0) ** 2 / 2.0) + jnp.mean(fake_outputs ** 2 / 2.0)
    assert jnp.allclose(loss, ref, rtol=1e-5, atol=1e-6), (loss, ref)

    print("KERNEL_OK")
</pallas_src>

<mosaic_0001>
module attributes {stable_mosaic.version = 11 : i64} {
  func.func @_sq_sum_tile_kernel(%arg0: i32, %arg1: memref<16x128xf32, #tpu.memory_space<vmem>>, %arg2: memref<1x8x128xf32, #tpu.memory_space<vmem>>) attributes {dimension_semantics = [#tpu.dimension_semantics<parallel>], iteration_bounds = array<i64: 1>, scalar_prefetch = 0 : i64, scratch_operands = 0 : i64, tpu.core_type = #tpu.core_type<tc>, window_params = [{transform_indices = @transform_0, window_bounds = array<i64: 16, 128>}, {transform_indices = @transform_1, window_bounds = array<i64: 1, 8, 128>}]} {
    %c0 = arith.constant 0 : index
    %c0_0 = arith.constant 0 : index
    %0 = vector.load %arg1[%c0, %c0_0] : memref<16x128xf32, #tpu.memory_space<vmem>>, vector<16x128xf32>
    %cst = arith.constant 1.000000e+00 : f32
    %1 = vector.broadcast %cst : f32 to vector<16x128xf32>
    %2 = arith.subf %0, %1 : vector<16x128xf32>
    %3 = arith.mulf %2, %2 : vector<16x128xf32>
    %4 = vector.shape_cast %3 : vector<16x128xf32> to vector<2x8x128xf32>
    %cst_1 = arith.constant dense<0.000000e+00> : vector<8x128xf32>
    %5 = vector.multi_reduction <add>, %4, %cst_1 [0] : vector<2x8x128xf32> to vector<8x128xf32>
    %c0_2 = arith.constant 0 : index
    %c0_3 = arith.constant 0 : index
    %c0_4 = arith.constant 0 : index
    %6 = vector.load %arg2[%c0_2, %c0_3, %c0_4] : memref<1x8x128xf32, #tpu.memory_space<vmem>>, vector<1x8x128xf32>
    %7 = vector.shape_cast %6 : vector<1x8x128xf32> to vector<8x128xf32>
    %8 = vector.shape_cast %5 : vector<8x128xf32> to vector<1x8x128xf32>
    tpu.vector_store %arg2[%c0_2, %c0_3, %c0_4], %8 {strides = array<i32>} : memref<1x8x128xf32, #tpu.memory_space<vmem>>, vector<1x8x128xf32>,
    return
  }
  func.func @transform_0(%arg0: i32) -> (i32, i32) {
    %c0_i32 = arith.constant 0 : i32
    %c0_i32_0 = arith.constant 0 : i32
    return %arg0, %c0_i32 : i32, i32
  }
  func.func @transform_1(%arg0: i32) -> (i32, i32, i32) {
    %c0_i32 = arith.constant 0 : i32
    %c0_i32_0 = arith.constant 0 : i32
    %c0_i32_1 = arith.constant 0 : i32
    return %arg0, %c0_i32, %c0_i32_0 : i32, i32, i32
  }
}

module attributes {stable_mosaic.version = 11 : i64} {
  func.func @_sq_sum_tile_kernel(%arg0: i32, %arg1: memref<16x128xf32, #tpu.memory_space<vmem>>, %arg2: memref<1x8x128xf32, #tpu.memory_space<vmem>>) attributes {dimension_semantics = [#tpu.dimension_semantics<parallel>], iteration_bounds = array<i64: 1>, scalar_prefetch = 0 : i64, scratch_operands = 0 : i64, tpu.core_type = #tpu.core_type<tc>, window_params = [{transform_indices = @transform_0, window_bounds = array<i64: 16, 128>}, {transform_indices = @transform_1, window_bounds = array<i64: 1, 8, 128>}]} {
    %c0 = arith.constant 0 : index
    %c0_0 = arith.constant 0 : index
    %0 = vector.load %arg1[%c0, %c0_0] : memref<16x128xf32, #tpu.memory_space<vmem>>, vector<16x128xf32>
    %cst = arith.constant 0.000000e+00 : f32
    %1 = vector.broadcast %cst : f32 to vector<16x128xf32>
    %2 = arith.subf %0, %1 : vector<16x128xf32>
    %3 = arith.mulf %2, %2 : vector<16x128xf32>
    %4 = vector.shape_cast %3 : vector<16x128xf32> to vector<2x8x128xf32>
    %cst_1 = arith.constant dense<0.000000e+00> : vector<8x128xf32>
    %5 = vector.multi_reduction <add>, %4, %cst_1 [0] : vector<2x8x128xf32> to vector<8x128xf32>
    %c0_2 = arith.constant 0 : index
    %c0_3 = arith.constant 0 : index
    %c0_4 = arith.constant 0 : index
    %6 = vector.load %arg2[%c0_2, %c0_3, %c0_4] : memref<1x8x128xf32, #tpu.memory_space<vmem>>, vector<1x8x128xf32>
    %7 = vector.shape_cast %6 : vector<1x8x128xf32> to vector<8x128xf32>
    %8 = vector.shape_cast %5 : vector<8x128xf32> to vector<1x8x128xf32>
    tpu.vector_store %arg2[%c0_2, %c0_3, %c0_4], %8 {strides = array<i32>} : memref<1x8x128xf32, #tpu.memory_space<vmem>>, vector<1x8x128xf32>,
    return
  }
  func.func @transform_0(%arg0: i32) -> (i32, i32) {
    %c0_i32 = arith.constant 0 : i32
    %c0_i32_0 = arith.constant 0 : i32
    return %arg0, %c0_i32 : i32, i32
  }
  func.func @transform_1(%arg0: i32) -> (i32, i32, i32) {
    %c0_i32 = arith.constant 0 : i32
    %c0_i32_0 = arith.constant 0 : i32
    %c0_i32_1 = arith.constant 0 : i32
    return %arg0, %c0_i32, %c0_i32_0 : i32, i32, i32
  }
}

</mosaic_0001>

<llo_original>
// kernel: discriminate_loss.2
$region0: #{discriminate_loss.2}
  #allocation0 [shape = 'u32[]', space=smem, size = 0x4, offset = 0x4, fixed_abs, tag = 'smem constant byte address 0x4 - core index']
  #allocation1 [shape = 'u32[144,128]{1,0:T(1,128)}', space=vmem, size = 0x12000, scoped, tag = 'internal scratch']
  %s0 = inlined_call_operand.vmem [shape: f32[16,128], index: 0, kind: input, shape index: {}]
  %s1 = inlined_call_operand.vmem [shape: f32[1,8,128], index: 1, kind: output, shape index: {}]
  %s2 = sld [smem:[#allocation0]]
  $region14: #{discriminate_loss.2} parent=0
    _
  %s4 = ssub.s32 1, %s2
  %s5 = scalar_select 0, %s4, %s2
  // Predicated region
  $region2: #{discriminate_loss.2} parent=0 // pred_check
    _
  $region3: #{discriminate_loss.2} parent=0 // pred_check_branch
    %7 = sbr.rel (0) target = $region5
  $region4: #{discriminate_loss.2} parent=0 // pred_region
    _
  $region5: #{discriminate_loss.2} parent=0 // pred_fallthru
    _
  %v8 = vld [vmem:[%s0] sm:$0xff]
  %v9 = vld [vmem:[%s0 + $0x8] sm:$0xff]
  %v10 = vsub.f32 %v8, 1.0
  %v11 = vsub.f32 %v9, 1.0
  %v12 = vmul.f32 %v10, %v10
  %v13 = vmul.f32 %v11, %v11
  %v14 = vadd.f32 %v12, %v13
  %15 = vst [vmem:[%s1] sm:$0xff] %v14
  // Predicated region
  $region6: #{discriminate_loss.2} parent=0 // pred_check
    _
  $region7: #{discriminate_loss.2} parent=0 // pred_check_branch
    %17 = sbr.rel (0) target = $region9
  $region8: #{discriminate_loss.2} parent=0 // pred_region
    _
  $region9: #{discriminate_loss.2} parent=0 // pred_fallthru
    _
  // Predicated region
  $region10: #{discriminate_loss.2} parent=0 // pred_check
    _
  $region11: #{discriminate_loss.2} parent=0 // pred_check_branch
    %19 = sbr.rel (0) target = $region13
  $region12: #{discriminate_loss.2} parent=0 // pred_region
    _
  $region13: #{discriminate_loss.2} parent=0 // pred_fallthru
    _

// kernel: discriminate_loss.3
$region0: #{discriminate_loss.3}
  #allocation0 [shape = 'u32[]', space=smem, size = 0x4, offset = 0x4, fixed_abs, tag = 'smem constant byte address 0x4 - core index']
  #allocation1 [shape = 'u32[144,128]{1,0:T(1,128)}', space=vmem, size = 0x12000, scoped, tag = 'internal scratch']
  %s0 = inlined_call_operand.vmem [shape: f32[16,128], index: 0, kind: input, shape index: {}]
  %s1 = inlined_call_operand.vmem [shape: f32[1,8,128], index: 1, kind: output, shape index: {}]
  %s2 = sld [smem:[#allocation0]]
  $region14: #{discriminate_loss.3} parent=0
    _
  %s4 = ssub.s32 1, %s2
  %s5 = scalar_select 0, %s4, %s2
  // Predicated region
  $region2: #{discriminate_loss.3} parent=0 // pred_check
    _
  $region3: #{discriminate_loss.3} parent=0 // pred_check_branch
    %7 = sbr.rel (0) target = $region5
  $region4: #{discriminate_loss.3} parent=0 // pred_region
    _
  $region5: #{discriminate_loss.3} parent=0 // pred_fallthru
    _
  %v8 = vld [vmem:[%s0] sm:$0xff]
  %v9 = vld [vmem:[%s0 + $0x8] sm:$0xff]
  %v10 = vmul.f32 %v8, %v8
  %v11 = vmul.f32 %v9, %v9
  %v12 = vadd.f32 %v10, %v11
  %13 = vst [vmem:[%s1] sm:$0xff] %v12
  // Predicated region
  $region6: #{discriminate_loss.3} parent=0 // pred_check
    _
  $region7: #{discriminate_loss.3} parent=0 // pred_check_branch
    %15 = sbr.rel (0) target = $region9
  $region8: #{discriminate_loss.3} parent=0 // pred_region
    _
  $region9: #{discriminate_loss.3} parent=0 // pred_fallthru
    _
  // Predicated region
  $region10: #{discriminate_loss.3} parent=0 // pred_check
    _
  $region11: #{discriminate_loss.3} parent=0 // pred_check_branch
    %17 = sbr.rel (0) target = $region13
  $region12: #{discriminate_loss.3} parent=0 // pred_region
    _
  $region13: #{discriminate_loss.3} parent=0 // pred_fallthru
    _

</llo_original>
